<compile_context>
chip_gen: v6e
topology: v6e:2x2x1
jax: 0.10.0
libtpu: 0.0.40
codegen_flags: <defaults>
</compile_context>

<pallas_src>
import functools

import jax
import jax.numpy as jnp
from jax import lax
from jax.experimental import pallas as pl
from jax.experimental.pallas import tpu as pltpu


def _self_attention_kernel(x_ref, w_ref, b_ref, o_ref, kvq_ref, *,
                           tb, s, d_out, d_pad, d_sub, approx_recip):
    """One grid step processes TB batch elements, rows flattened to TB*S.

    x_ref:   (TB*S, D_in)     compute dtype
    w_ref:   (D_in, 3*D_pad)  compute dtype — fused, zero-padded [K | V | Q] weights
    b_ref:   (1, 3*D_pad)     f32 — fused, zero-padded biases
    o_ref:   (TB*S, D_out)    output dtype (unpadded lanes)
    kvq_ref: (TB*S, 3*D_pad)  compute-dtype VMEM scratch
    """
    cdt = w_ref.dtype

    # Fused K/V/Q projection: one wide MXU matmul, f32 accumulation, bias added once
    # in f32, a single cast into the scratch buffer.
    kvq_ref[...] = (jnp.dot(x_ref[...], w_ref[...],
                            preferred_element_type=jnp.float32)
                    + b_ref[...]).astype(cdt)

    # Lane-padding mask as a tiny (1, D_pad) additive bias — only real feature
    # columns participate in the softmax normalization.
    if d_pad != d_out:
        col = lax.broadcasted_iota(jnp.int32, (1, d_pad), 1)
        col_bias = jnp.where(col < d_out, 0.0, -1e30).astype(jnp.float32)
    else:
        col_bias = None

    # Zero rows used to pad alpha back to D_pad sublanes (hoisted out of the loop).
    if d_sub != d_pad:
        alpha_tail = jnp.zeros((d_pad - d_sub, d_pad), dtype=cdt)
    else:
        alpha_tail = None

    def body(b, carry):
        row0 = b * s
        if s % 8 == 0:
            row0 = pl.multiple_of(row0, 8)
        kvq_b = kvq_ref[pl.ds(row0, s), :]            # (S, 3*D_pad)
        k_b = kvq_b[:, :d_pad]
        v_b = kvq_b[:, d_pad:2 * d_pad]
        q_b = kvq_b[:, 2 * d_pad:]

        # scores[i, j] = sum_s q[s, i] * k[s, j]  ->  (D_pad, D_pad), f32 on the MXU.
        scores = lax.dot_general(q_b, k_b, (((0,), (0,)), ((), ())),
                                 preferred_element_type=jnp.float32)

        # Only the first D_sub sublane rows matter: rows >= D_out come from the
        # zero-padded q features and later multiply zero-padded v features.
        sc = scores[:d_sub, :]
        if col_bias is not None:
            sc = sc + col_bias

        # Numerically stable softmax over the feature axis, kept in f32.
        sc = sc - jnp.max(sc, axis=-1, keepdims=True)
        e = jnp.exp(sc)
        alpha = e * pl.reciprocal(jnp.sum(e, axis=-1, keepdims=True),
                                  approx=approx_recip)

        alpha_c = alpha.astype(cdt)
        if alpha_tail is not None:
            alpha_c = jnp.concatenate([alpha_c, alpha_tail], axis=0)  # (D_pad, D_pad)

        # out[s, j] = sum_d v[s, d] * alpha[d, j]   (f32 accumulation)
        out_b = jnp.dot(v_b, alpha_c, preferred_element_type=jnp.float32)
        o_ref[pl.ds(row0, s), :] = out_b[:, :d_out].astype(o_ref.dtype)
        return carry

    lax.fori_loop(0, tb, body, 0)


def _vmem_plan():
    """Generation-aware (vmem_limit_bytes, min_grid_steps)."""
    try:
        cap = int(pltpu.get_tpu_info().vmem_capacity_bytes)
    except Exception:  # non-TPU backend / older jax — conservative, safe defaults
        return 48 * 1024 * 1024, 1
    limit = (cap * 3) // 4                              # ~48 MiB on v7x, ~96 MiB on v5e/v6e
    min_steps = 2 if cap <= 80 * 1024 * 1024 else 1     # v7x: 2 TCs share the grid
    return limit, min_steps


def _choose_tb(batch, s, per_b_bytes, budget_bytes, min_steps):
    """Batch tile that fits the VMEM budget, minimizes padded work (B need not be
    divisible by TB), keeps row blocks sublane-aligned, and respects the minimum
    grid-step count needed for megacore sharding."""
    min_steps = min(min_steps, batch)
    if min_steps > 1 and batch * s < 512:
        min_steps = 1          # don't split a half-empty MXU across TensorCores
    best_key, best = None, None
    for cand in range(batch, 0, -1):
        steps = -(-batch // cand)
        if steps < min_steps:
            continue
        if steps > 1 and (cand * s) % 8:
            continue           # row block must stay (8,)-aligned when tiled
        if cand * per_b_bytes > budget_bytes:
            continue
        key = (steps * cand, -cand)       # least padded work, then largest tile
        if best_key is None or key < best_key:
            best_key, best = key, cand
    return best if best is not None else batch


def self_attention(x, wk, bk, wv, bv, wq, bq, *, compute_dtype=jnp.bfloat16):
    """x: (B, S, D_in); w*: (D_out, D_in) PyTorch Linear layout; b*: (D_out,)."""
    B, S, D_in = x.shape
    D_out = wk.shape[0]
    LANE, SUB = 128, 8
    D_pad = pl.cdiv(D_out, LANE) * LANE
    D_sub = min(D_pad, pl.cdiv(D_out, SUB) * SUB)

    cdt = jnp.dtype(compute_dtype)
    out_dt = x.dtype

    # One-time weight prep: transpose, zero-pad features to lane width, fuse K|V|Q.
    def prep_w(w):
        wt = jnp.asarray(w).T.astype(cdt)                       # (D_in, D_out)
        return jnp.pad(wt, ((0, 0), (0, D_pad - D_out)))        # (D_in, D_pad)

    def prep_b(b):
        return jnp.pad(jnp.asarray(b).astype(jnp.float32), (0, D_pad - D_out))

    w_fused = jnp.concatenate([prep_w(wk), prep_w(wv), prep_w(wq)], axis=1)   # (D_in, 3*D_pad)
    b_fused = jnp.concatenate([prep_b(bk), prep_b(bv), prep_b(bq)])[None, :]  # (1, 3*D_pad)

    vmem_limit, min_steps = _vmem_plan()

    # Per-batch-element VMEM bytes inside one grid step.
    per_b = 2 * S * D_in * cdt.itemsize                    # double-buffered x tile
    per_b += 2 * S * D_out * jnp.dtype(out_dt).itemsize    # double-buffered out tile
    per_b += S * 3 * D_pad * cdt.itemsize                  # kvq scratch
    fixed = 2 * D_in * 3 * D_pad * cdt.itemsize            # resident fused weights
    fixed += 2 * 3 * D_pad * 4                             # fused bias
    fixed += 4 * D_pad * D_pad * 4                         # scores / alpha temporaries
    fixed += 4 * 1024 * 1024                               # compiler scratch / spill slack
    budget = max(vmem_limit - fixed, per_b)
    TB = _choose_tb(B, S, per_b, budget, min_steps)

    steps = pl.cdiv(B, TB)
    B_pad = steps * TB

    # Wrapper-side reshape (metadata only) + zero-pad batch when B % TB != 0.
    x2 = x.astype(cdt).reshape(B * S, D_in)
    if B_pad != B:
        x2 = jnp.pad(x2, ((0, (B_pad - B) * S), (0, 0)))

    approx_recip = cdt != jnp.dtype(jnp.float32)
    kernel = functools.partial(
        _self_attention_kernel, tb=TB, s=S, d_out=D_out, d_pad=D_pad,
        d_sub=D_sub, approx_recip=approx_recip)

    out2 = pl.pallas_call(
        kernel,
        out_shape=jax.ShapeDtypeStruct((B_pad * S, D_out), out_dt),
        grid_spec=pltpu.PrefetchScalarGridSpec(
            num_scalar_prefetch=0,
            grid=(steps,),
            in_specs=[
                pl.BlockSpec((TB * S, D_in), lambda b: (b, 0)),
                pl.BlockSpec((D_in, 3 * D_pad), lambda b: (0, 0)),
                pl.BlockSpec((1, 3 * D_pad), lambda b: (0, 0)),
            ],
            out_specs=pl.BlockSpec((TB * S, D_out), lambda b: (b, 0)),
            scratch_shapes=[pltpu.VMEM((TB * S, 3 * D_pad), cdt)],
        ),
        compiler_params=pltpu.CompilerParams(
            dimension_semantics=("parallel",),
            vmem_limit_bytes=vmem_limit,
        ),
    )(x2, w_fused, b_fused)

    out = out2.reshape(B_pad, S, D_out)
    return out[:B] if B_pad != B else out


def _reference(x, wk, bk, wv, bv, wq, bq):
    k = x @ wk.T + bk
    v = x @ wv.T + bv
    q = x @ wq.T + bq
    scores = jnp.swapaxes(q, -2, -1) @ k
    alpha = jax.nn.softmax(scores, axis=-1)
    return v @ alpha


if __name__ == "__main__":
    B, S, D_in, D_out = 2, 8, 32, 16

    key = jax.random.PRNGKey(0)
    kx, kk, kbk, kv, kbv, kq, kbq = jax.random.split(key, 7)

    x = jax.random.normal(kx, (B, S, D_in), dtype=jnp.float32)
    # PyTorch Linear shapes: W (out, in), b (out,)
    wk = jax.random.normal(kk, (D_out, D_in), dtype=jnp.float32) * 0.1
    bk = jax.random.normal(kbk, (D_out,), dtype=jnp.float32) * 0.1
    wv = jax.random.normal(kv, (D_out, D_in), dtype=jnp.float32) * 0.1
    bv = jax.random.normal(kbv, (D_out,), dtype=jnp.float32) * 0.1
    wq = jax.random.normal(kq, (D_out, D_in), dtype=jnp.float32) * 0.1
    bq = jax.random.normal(kbq, (D_out,), dtype=jnp.float32) * 0.1

    ref = _reference(x, wk, bk, wv, bv, wq, bq)

    # Exact path (f32 compute) — strict check against the JAX reference.
    out_f32 = jax.block_until_ready(
        self_attention(x, wk, bk, wv, bv, wq, bq, compute_dtype=jnp.float32))
    assert out_f32.shape == (B, S, D_out)
    assert jnp.allclose(out_f32, ref, atol=1e-4, rtol=1e-4), "f32 mismatch vs reference"

    # Fast path (bf16 MXU inputs, f32 accumulation + f32 softmax) — loose check.
    out_bf16 = jax.block_until_ready(
        self_attention(x, wk, bk, wv, bv, wq, bq, compute_dtype=jnp.bfloat16))
    assert out_bf16.shape == (B, S, D_out)
    assert jnp.allclose(out_bf16, ref, atol=1e-1, rtol=1e-1), "bf16 mismatch vs reference"

    print("KERNEL_OK")
</pallas_src>

<mosaic_0001>
module attributes {stable_mosaic.version = 11 : i64} {
  func.func @_self_attention_kernel(%arg0: i32, %arg1: memref<16x32xf32, #tpu.memory_space<vmem>>, %arg2: memref<32x384xf32, #tpu.memory_space<vmem>>, %arg3: memref<1x384xf32, #tpu.memory_space<vmem>>, %arg4: memref<16x16xf32, #tpu.memory_space<vmem>>, %arg5: memref<16x384xf32, #tpu.memory_space<vmem>>) attributes {dimension_semantics = [#tpu.dimension_semantics<parallel>], iteration_bounds = array<i64: 1>, scalar_prefetch = 0 : i64, scratch_operands = 1 : i64, tpu.core_type = #tpu.core_type<tc>, window_params = [{transform_indices = @transform_0, window_bounds = array<i64: 16, 32>}, {pipeline_mode = #tpu.pipeline_mode<synchronous>, transform_indices = @transform_1, window_bounds = array<i64: 32, 384>}, {pipeline_mode = #tpu.pipeline_mode<synchronous>, transform_indices = @transform_2, window_bounds = array<i64: 1, 384>}, {transform_indices = @transform_3, window_bounds = array<i64: 16, 16>}]} {
    %c0 = arith.constant 0 : index
    %c0_0 = arith.constant 0 : index
    %0 = vector.load %arg1[%c0, %c0_0] : memref<16x32xf32, #tpu.memory_space<vmem>>, vector<16x32xf32>
    %c0_1 = arith.constant 0 : index
    %c0_2 = arith.constant 0 : index
    %1 = vector.load %arg2[%c0_1, %c0_2] : memref<32x384xf32, #tpu.memory_space<vmem>>, vector<32x384xf32>
    %cst = arith.constant dense<0.000000e+00> : vector<16x384xf32>
    %2 = tpu.matmul %0, %1, %cst {dimension_numbers = #tpu.dot_dimension_numbers<[1], [0], [0], [1], [0, 0, 1, 1], [], []>} : vector<16x32xf32>, vector<32x384xf32>, vector<16x384xf32> -> vector<16x384xf32>
    %c0_3 = arith.constant 0 : index
    %c0_4 = arith.constant 0 : index
    %3 = vector.load %arg3[%c0_3, %c0_4] : memref<1x384xf32, #tpu.memory_space<vmem>>, vector<1x384xf32>
    %4 = vector.broadcast %3 : vector<1x384xf32> to vector<16x384xf32>
    %5 = arith.addf %2, %4 : vector<16x384xf32>
    %c0_5 = arith.constant 0 : index
    %c0_6 = arith.constant 0 : index
    %6 = vector.load %arg5[%c0_5, %c0_6] : memref<16x384xf32, #tpu.memory_space<vmem>>, vector<16x384xf32>
    tpu.vector_store %arg5[%c0_5, %c0_6], %5 {strides = array<i32>} : memref<16x384xf32, #tpu.memory_space<vmem>>, vector<16x384xf32>,
    %7 = tpu.iota {dimensions = array<i32: 1>} : vector<1x128xi32>
    %c16_i32 = arith.constant 16 : i32
    %8 = vector.broadcast %c16_i32 : i32 to vector<1x128xi32>
    %9 = arith.cmpi slt, %7, %8 : vector<1x128xi32>
    %cst_7 = arith.constant 0.000000e+00 : f32
    %cst_8 = arith.constant -1.000000e+30 : f32
    %10 = vector.broadcast %cst_7 : f32 to vector<1x128xf32>
    %11 = vector.broadcast %cst_8 : f32 to vector<1x128xf32>
    %12 = arith.select %9, %10, %11 : vector<1x128xi1>, vector<1x128xf32>
    %cst_9 = arith.constant 0.000000e+00 : f32
    %13 = vector.broadcast %cst_9 : f32 to vector<112x128xf32>
    %c0_i32 = arith.constant 0 : i32
    %c2_i32 = arith.constant 2 : i32
    %14 = arith.addi %c0_i32, %c2_i32 : i32
    %c1_i32 = arith.constant 1 : i32
    scf.for %arg6 = %c0_i32 to %14 step %c1_i32  : i32 {
      %c8_i32 = arith.constant 8 : i32
      %15 = arith.muli %arg6, %c8_i32 : i32
      %16 = tpu.assume_multiple %15, 8 : i32
      %17 = arith.index_cast %16 : i32 to index
      %c0_11 = arith.constant 0 : index
      %18 = vector.load %arg5[%17, %c0_11] : memref<16x384xf32, #tpu.memory_space<vmem>>, vector<8x384xf32>
      %19 = vector.extract_strided_slice %18 {offsets = [0, 0], sizes = [8, 128], strides = [1, 1]} : vector<8x384xf32> to vector<8x128xf32>
      %20 = vector.extract_strided_slice %18 {offsets = [0, 128], sizes = [8, 128], strides = [1, 1]} : vector<8x384xf32> to vector<8x128xf32>
      %21 = vector.extract_strided_slice %18 {offsets = [0, 256], sizes = [8, 128], strides = [1, 1]} : vector<8x384xf32> to vector<8x128xf32>
      %cst_12 = arith.constant dense<0.000000e+00> : vector<128x128xf32>
      %22 = tpu.matmul %21, %19, %cst_12 {dimension_numbers = #tpu.dot_dimension_numbers<[0], [0], [1], [1], [0, 1, 1, 1], [], []>} : vector<8x128xf32>, vector<8x128xf32>, vector<128x128xf32> -> vector<128x128xf32>
      %23 = vector.extract_strided_slice %22 {offsets = [0, 0], sizes = [16, 128], strides = [1, 1]} : vector<128x128xf32> to vector<16x128xf32>
      %24 = vector.broadcast %12 : vector<1x128xf32> to vector<16x128xf32>
      %25 = arith.addf %23, %24 : vector<16x128xf32>
      %cst_13 = arith.constant dense<0xFF800000> : vector<16xf32>
      %26 = vector.multi_reduction <maximumf>, %25, %cst_13 [1] : vector<16x128xf32> to vector<16xf32>
      %27 = vector.shape_cast %26 : vector<16xf32> to vector<16x1xf32>
      %28 = vector.broadcast %27 : vector<16x1xf32> to vector<16x128xf32>
      %29 = arith.subf %25, %28 : vector<16x128xf32>
      %30 = math.exp %29 : vector<16x128xf32>
      %cst_14 = arith.constant dense<0.000000e+00> : vector<16xf32>
      %31 = vector.multi_reduction <add>, %30, %cst_14 [1] : vector<16x128xf32> to vector<16xf32>
      %32 = vector.shape_cast %31 : vector<16xf32> to vector<16x1xf32>
      %33 = tpu.reciprocal %32 : vector<16x1xf32> -> vector<16x1xf32>
      %34 = vector.broadcast %33 : vector<16x1xf32> to vector<16x128xf32>
      %35 = arith.mulf %30, %34 : vector<16x128xf32>
      %36 = tpu.concatenate %35, %13 in 0 : vector<16x128xf32>, vector<112x128xf32> -> vector<128x128xf32>
      %cst_15 = arith.constant dense<0.000000e+00> : vector<8x128xf32>
      %37 = tpu.matmul %20, %36, %cst_15 {dimension_numbers = #tpu.dot_dimension_numbers<[1], [0], [0], [1], [0, 0, 1, 1], [], []>} : vector<8x128xf32>, vector<128x128xf32>, vector<8x128xf32> -> vector<8x128xf32>
      %38 = vector.extract_strided_slice %37 {offsets = [0, 0], sizes = [8, 16], strides = [1, 1]} : vector<8x128xf32> to vector<8x16xf32>
      %39 = arith.index_cast %16 : i32 to index
      %c0_16 = arith.constant 0 : index
      %40 = vector.load %arg4[%39, %c0_16] : memref<16x16xf32, #tpu.memory_space<vmem>>, vector<8x16xf32>
      tpu.vector_store %arg4[%39, %c0_16], %38 {strides = array<i32>} : memref<16x16xf32, #tpu.memory_space<vmem>>, vector<8x16xf32>,
    }
    %c2_i32_10 = arith.constant 2 : i32
    return
  }
  func.func @transform_0(%arg0: i32) -> (i32, i32) {
    %c0_i32 = arith.constant 0 : i32
    %c0_i32_0 = arith.constant 0 : i32
    return %arg0, %c0_i32 : i32, i32
  }
  func.func @transform_1(%arg0: i32) -> (i32, i32) {
    %c0_i32 = arith.constant 0 : i32
    %c0_i32_0 = arith.constant 0 : i32
    %c0_i32_1 = arith.constant 0 : i32
    return %c0_i32, %c0_i32_0 : i32, i32
  }
  func.func @transform_2(%arg0: i32) -> (i32, i32) {
    %c0_i32 = arith.constant 0 : i32
    %c0_i32_0 = arith.constant 0 : i32
    %c0_i32_1 = arith.constant 0 : i32
    return %c0_i32, %c0_i32_0 : i32, i32
  }
  func.func @transform_3(%arg0: i32) -> (i32, i32) {
    %c0_i32 = arith.constant 0 : i32
    %c0_i32_0 = arith.constant 0 : i32
    return %arg0, %c0_i32 : i32, i32
  }
}

</mosaic_0001>

<llo_original>
// kernel: tpu_custom_call.1
$region0: #{tpu_custom_call.1}
  #allocation0 [shape = 'u32[]', space=smem, size = 0x4, offset = 0x4, fixed_abs, tag = 'smem constant byte address 0x4 - core index']
  #allocation1 [shape = 'u32[144,128]{1,0:T(1,128)}', space=vmem, size = 0x12000, scoped, tag = 'internal scratch']
  #allocation2 [shape = 'f32[16,384]{1,0:T(8,128)}', space=vmem, size = 0x6000, scoped, tag = 'scratch operand']
  %s0 = inlined_call_operand.hbm [shape: f32[16,32], index: 0, kind: input, shape index: {}]
  %s1 = inlined_call_operand.hbm [shape: f32[32,384], index: 1, kind: input, shape index: {}]
  %s2 = inlined_call_operand.vmem [shape: f32[1,384], index: 2, kind: input, shape index: {}]
  %s3 = inlined_call_operand.hbm [shape: f32[16,16], index: 3, kind: output, shape index: {}]
  %s4 = sld [smem:[#allocation0]]
  $region37: #{tpu_custom_call.1} parent=0
    _
  %s6 = ssub.s32 1, %s4
  %s7 = scalar_select 0, %s6, %s4
  $region1: #{tpu_custom_call.1} parent=0
    #allocation3 [shape = 'u8[8192]{0}', space=vmem, size = 0x2000, scoped, tag = 'input window, operand 0, single buffered']
    #allocation4 [shape = 's32[1]{0}', space=sflag, size = 0x4, scoped, tag = 'scoped memory for tpu_custom_call.1']
    #allocation5 [shape = 's32[1]{0}', space=sflag, size = 0x4, scoped, tag = 'scoped memory for tpu_custom_call.1']
    #allocation6 [shape = 'u8[49152]{0}', space=vmem, size = 0xc000, scoped, tag = 'input window, operand 1, single buffered']
    #allocation7 [shape = 's32[1]{0}', space=sflag, size = 0x4, scoped, tag = 'scoped memory for tpu_custom_call.1']
    #allocation8 [shape = 'u8[8192]{0}', space=vmem, size = 0x2000, scoped, tag = 'output window, operand 0, single buffered']
    %8 = vsyncpa [#allocation4], 0
    %9 = vsyncpa [#allocation7], 0
    %10 = vsyncpa [#allocation5], 0
    // Predicated region
    $region2: #{tpu_custom_call.1} parent=1 // pred_check
      _
    $region3: #{tpu_custom_call.1} parent=1 // pred_check_branch
      %12 = sbr.rel (0) target = $region5
    $region4: #{tpu_custom_call.1} parent=1 // pred_region
      %s14 = ssub.s32 256, 256
      %15 = vsyncadd [#allocation4], %s14
      %s16 = sshll.u32 [#allocation3], 4
      %s17 = int_to_ptr.vmem [resolvable:$true] %s16
      %22 = dma.hbm_to_vmem [thread:$0]  %s0, 256, %s17, [#allocation4], 128, 128, 8
    $region5: #{tpu_custom_call.1} parent=1 // pred_fallthru
      _
    // Predicated region
    $region6: #{tpu_custom_call.1} parent=1 // pred_check
      _
    $region7: #{tpu_custom_call.1} parent=1 // pred_check_branch
      %24 = sbr.rel (0) target = $region9
    $region8: #{tpu_custom_call.1} parent=1 // pred_region
      %s26 = ssub.s32 1536, 1536
      %27 = vsyncadd [#allocation7], %s26
      %s28 = sshll.u32 [#allocation6], 4
      %s29 = int_to_ptr.vmem [resolvable:$true] %s28
      %34 = dma.hbm_to_vmem [thread:$0]  %s1, 1536, %s29, [#allocation7], 384, 384, 24
    $region9: #{tpu_custom_call.1} parent=1 // pred_fallthru
      _
    // Predicated region
    $region10: #{tpu_custom_call.1} parent=1 // pred_check
      _
    $region11: #{tpu_custom_call.1} parent=1 // pred_check_branch
      %36 = sbr.rel (0) target = $region13
    $region12: #{tpu_custom_call.1} parent=1 // pred_region
      _
    $region13: #{tpu_custom_call.1} parent=1 // pred_fallthru
      _
    // Predicated region
    $region14: #{tpu_custom_call.1} parent=1 // pred_check
      _
    $region15: #{tpu_custom_call.1} parent=1 // pred_check_branch
      %38 = sbr.rel (0) target = $region17
    $region16: #{tpu_custom_call.1} parent=1 // pred_region
      %39 = dma.done [#allocation4], 256
    $region17: #{tpu_custom_call.1} parent=1 // pred_fallthru
      _
    // Predicated region
    $region18: #{tpu_custom_call.1} parent=1 // pred_check
      _
    $region19: #{tpu_custom_call.1} parent=1 // pred_check_branch
      %41 = sbr.rel (0) target = $region21
    $region20: #{tpu_custom_call.1} parent=1 // pred_region
      %42 = dma.done [#allocation7], 1536
    $region21: #{tpu_custom_call.1} parent=1 // pred_fallthru
      _
    %v43 = vld [vmem:[#allocation3] sm:$0xff]
    %v44 = vld [vmem:[#allocation3 + $0x8] sm:$0xff]
    %v45 = vld [vmem:[#allocation6] sm:$0xff]
    %v46 = vld [vmem:[#allocation6 + $0x8] sm:$0xff]
    %v47 = vld [vmem:[#allocation6 + $0x10] sm:$0xff]
    %v48 = vld [vmem:[#allocation6 + $0x18] sm:$0xff]
    %v49 = vld [vmem:[#allocation6 + $0x20] sm:$0xff]
    %v50 = vld [vmem:[#allocation6 + $0x28] sm:$0xff]
    %v51 = vld [vmem:[#allocation6 + $0x30] sm:$0xff]
    %v52 = vld [vmem:[#allocation6 + $0x38] sm:$0xff]
    %v53 = vld [vmem:[#allocation6 + $0x40] sm:$0xff]
    %v54 = vld [vmem:[#allocation6 + $0x48] sm:$0xff]
    %v55 = vld [vmem:[#allocation6 + $0x50] sm:$0xff]
    %v56 = vld [vmem:[#allocation6 + $0x58] sm:$0xff]
    %v57 = vld [vmem:[%s2] sm:$0x7]
    %v59 = vlaneseq
    %v60 = vshrl.u32 %v59, 7
    %v61 = vsub.s32 0, %v60
    %v62 = vrot.slane %v57, %v61
    %v63 = vlaneseq
    %v64 = vshrl.u32 %v63, 7
    %v65 = vsub.s32 1, %v64
    %v66 = vrot.slane %v57, %v65
    %v67 = vlaneseq
    %v68 = vshrl.u32 %v67, 7
    %v69 = vsub.s32 2, %v68
    %v70 = vrot.slane %v57, %v69
    %vm74 = vcmask 261120
    %v76 = vsel %vm74, %v43, 0
    %v79 = vsel %vm74, %v44, 0
    %81 = vmatprep.subr.mxu0 0.0
    %82 = vmatpush1.msra.mxu0 0.0
    %83 = vmatprep.subr.mxu0 0.0
    %84 = vmatpush1.msra.mxu0 0.0
    %85 = vmatprep.subr.mxu0 0.0
    %86 = vmatpush1.msra.mxu0 0.0
    %87 = vmatprep.subr.mxu0 0.0
    %88 = vmatpush1.msra.mxu0 0.0
    %89 = vmatprep.subr.mxu0 0.0
    %90 = vmatpush1.msra.mxu0 0.0
    %91 = vmatprep.subr.mxu0 0.0
    %92 = vmatpush1.msra.mxu0 0.0
    %93 = vmatprep.subr.mxu0 0.0
    %94 = vmatpush1.msra.mxu0 0.0
    %95 = vmatprep.subr.mxu0 0.0
    %96 = vmatpush1.msra.mxu0 0.0
    %97 = vmatprep.subr.mxu0 0.0
    %98 = vmatpush1.msra.mxu0 0.0
    %99 = vmatprep.subr.mxu0 0.0
    %100 = vmatpush1.msra.mxu0 0.0
    %101 = vmatprep.subr.mxu0 0.0
    %102 = vmatpush1.msra.mxu0 0.0
    %103 = vmatprep.subr.mxu0 0.0
    %104 = vmatpush1.msra.mxu0 0.0
    %105 = vmatprep.subr.mxu0 %v55
    %106 = vmatpush1.msra.mxu0 %v54
    %107 = vmatprep.subr.mxu0 %v52
    %108 = vmatpush1.msra.mxu0 %v51
    %109 = vmatprep.subr.mxu0 %v49
    %110 = vmatpush1.msra.mxu0 %v48
    %111 = vmatprep.subr.mxu0 %v46
    %112 = vmatpush1.msra.mxu0 %v45
    %113 = vmatprep.subr.mxu0 0.0
    %114 = vmatpush2.msra.mxu0 0.0
    %115 = vmatprep.subr.mxu0 0.0
    %116 = vmatpush2.msra.mxu0 0.0
    %117 = vmatprep.subr.mxu0 0.0
    %118 = vmatpush2.msra.mxu0 0.0
    %119 = vmatprep.subr.mxu0 0.0
    %120 = vmatpush2.msra.mxu0 0.0
    %121 = vmatprep.subr.mxu0 0.0
    %122 = vmatpush2.msra.mxu0 0.0
    %123 = vmatprep.subr.mxu0 0.0
    %124 = vmatpush2.msra.mxu0 0.0
    %125 = vmatprep.subr.mxu0 0.0
    %126 = vmatpush2.msra.mxu0 0.0
    %127 = vmatprep.subr.mxu0 0.0
    %128 = vmatpush2.msra.mxu0 0.0
    %129 = vmatprep.subr.mxu0 0.0
    %130 = vmatpush2.msra.mxu0 0.0
    %131 = vmatprep.subr.mxu0 0.0
    %132 = vmatpush2.msra.mxu0 0.0
    %133 = vmatprep.subr.mxu0 0.0
    %134 = vmatpush2.msra.mxu0 0.0
    %135 = vmatprep.subr.mxu0 0.0
    %136 = vmatpush2.msra.mxu0 0.0
    %137 = vmatprep.subr.mxu0 0.0
    %138 = vmatpush2.msra.mxu0 0.0
    %139 = vmatprep.subr.mxu0 0.0
    %140 = vmatpush2.msra.mxu0 0.0
    %141 = vmatprep.subr.mxu0 0.0
    %142 = vmatpush2.msra.mxu0 0.0
    %143 = vmatprep.subr.mxu0 0.0
    %144 = vmatpush2.msra.mxu0 0.0
    %145 = vmatprep.mubr.f32.mxu0 0.0
    %146 = vmatmul.mubr.f32.gmra.mxu0 %v76
    %v147 = vpop.f32.mrf.mxu0
    %v148 = vadd.f32 %v62, %v147
    %v149 = vpop.f32.mrf.mxu0
    %v150 = vadd.f32 %v66, %v149
    %151 = vmatprep.mubr.f32.mxu0 0.0
    %152 = vmatmul.mubr.f32.gmra.mxu0 %v79
    %v153 = vpop.f32.mrf.mxu0
    %v154 = vadd.f32 %v62, %v153
    %v155 = vpop.f32.mrf.mxu0
    %v156 = vadd.f32 %v66, %v155
    %157 = vdwg.mxu0
    %158 = vmatprep.subr.mxu0 0.0
    %159 = vmatpush1.msra.mxu0 0.0
    %160 = vmatprep.subr.mxu0 0.0
    %161 = vmatpush1.msra.mxu0 0.0
    %162 = vmatprep.subr.mxu0 0.0
    %163 = vmatpush1.msra.mxu0 0.0
    %164 = vmatprep.subr.mxu0 0.0
    %165 = vmatpush1.msra.mxu0 0.0
    %166 = vmatprep.subr.mxu0 0.0
    %167 = vmatpush1.msra.mxu0 0.0
    %168 = vmatprep.subr.mxu0 0.0
    %169 = vmatpush1.msra.mxu0 0.0
    %170 = vmatprep.subr.mxu0 0.0
    %171 = vmatpush1.msra.mxu0 0.0
    %172 = vmatprep.subr.mxu0 0.0
    %173 = vmatpush1.msra.mxu0 0.0
    %174 = vmatprep.subr.mxu0 0.0
    %175 = vmatpush1.msra.mxu0 0.0
    %176 = vmatprep.subr.mxu0 0.0
    %177 = vmatpush1.msra.mxu0 0.0
    %178 = vmatprep.subr.mxu0 0.0
    %179 = vmatpush1.msra.mxu0 0.0
    %180 = vmatprep.subr.mxu0 0.0
    %181 = vmatpush1.msra.mxu0 0.0
    %182 = vmatprep.subr.mxu0 0.0
    %183 = vmatpush1.msra.mxu0 %v56
    %184 = vmatprep.subr.mxu0 0.0
    %185 = vmatpush1.msra.mxu0 %v53
    %186 = vmatprep.subr.mxu0 0.0
    %187 = vmatpush1.msra.mxu0 %v50
    %188 = vmatprep.subr.mxu0 0.0
    %189 = vmatpush1.msra.mxu0 %v47
    %190 = vmatprep.subr.mxu0 0.0
    %191 = vmatpush2.msra.mxu0 0.0
    %192 = vmatprep.subr.mxu0 0.0
    %193 = vmatpush2.msra.mxu0 0.0
    %194 = vmatprep.subr.mxu0 0.0
    %195 = vmatpush2.msra.mxu0 0.0
    %196 = vmatprep.subr.mxu0 0.0
    %197 = vmatpush2.msra.mxu0 0.0
    %198 = vmatprep.subr.mxu0 0.0
    %199 = vmatpush2.msra.mxu0 0.0
    %200 = vmatprep.subr.mxu0 0.0
    %201 = vmatpush2.msra.mxu0 0.0
    %202 = vmatprep.subr.mxu0 0.0
    %203 = vmatpush2.msra.mxu0 0.0
    %204 = vmatprep.subr.mxu0 0.0
    %205 = vmatpush2.msra.mxu0 0.0
    %206 = vmatprep.subr.mxu0 0.0
    %207 = vmatpush2.msra.mxu0 0.0
    %208 = vmatprep.subr.mxu0 0.0
    %209 = vmatpush2.msra.mxu0 0.0
    %210 = vmatprep.subr.mxu0 0.0
    %211 = vmatpush2.msra.mxu0 0.0
    %212 = vmatprep.subr.mxu0 0.0
    %213 = vmatpush2.msra.mxu0 0.0
    %214 = vmatprep.subr.mxu0 0.0
    %215 = vmatpush2.msra.mxu0 0.0
    %216 = vmatprep.subr.mxu0 0.0
    %217 = vmatpush2.msra.mxu0 0.0
    %218 = vmatprep.subr.mxu0 0.0
    %219 = vmatpush2.msra.mxu0 0.0
    %220 = vmatprep.subr.mxu0 0.0
    %221 = vmatpush2.msra.mxu0 0.0
    %222 = vmatprep.mubr.f32.mxu0 0.0
    %223 = vmatmul.mubr.f32.gmra.mxu0 %v76
    %v224 = vpop.f32.mrf.mxu0
    %v225 = vadd.f32 %v70, %v224
    %v226 = vpop.f32.mrf.mxu0
    %227 = vmatprep.mubr.f32.mxu0 0.0
    %228 = vmatmul.mubr.f32.gmra.mxu0 %v79
    %v229 = vpop.f32.mrf.mxu0
    %v230 = vadd.f32 %v70, %v229
    %v231 = vpop.f32.mrf.mxu0
    %232 = vdwg.mxu0
    %233 = vst [vmem:[#allocation2] sm:$0xff] %v148
    %234 = vst [vmem:[#allocation2 + $0x8] sm:$0xff] %v150
    %235 = vst [vmem:[#allocation2 + $0x10] sm:$0xff] %v225
    %236 = vst [vmem:[#allocation2 + $0x18] sm:$0xff] %v154
    %237 = vst [vmem:[#allocation2 + $0x20] sm:$0xff] %v156
    %238 = vst [vmem:[#allocation2 + $0x28] sm:$0xff] %v230
    %v239 = vlaneseq
    %v240 = vand.u32 %v239, 127
    %vm241 = vcmp.lt.s32.totalorder %v240, 16
    %v242 = vsel %vm241, 0.0, -1e+30
    loop: start=0, step=1, limit=2
    $region22: #{tpu_custom_call.1} parent=1 // loop_pre_header
      _
    $region23: #{tpu_custom_call.1} parent=1 // loop_header
      %s244 = sphi 0, %s248
      %p245 = scmp.ge.s32.totalorder %s244, 2
    $region24: #{tpu_custom_call.1} parent=1 // loop_header_branch
      %247 = sbr.rel (%p245) target = $region28
    $region25: #{tpu_custom_call.1} parent=1 // loop_body
      %s249 = smul.u32 %s244, 8
      %s250 = sshra.s32 %s249, 3
      %s251 = sand.u32 %s249, 7
      %s252 = smul.u32 %s250, 3
      %s253 = smul.addr %s252, 8
      %s254 = scalar_lea.vmem [#allocation2], %s253
      %v255 = vld [vmem:[%s254] sm:$0xff]
      %v256 = vld [vmem:[%s254 + $0x8] sm:$0xff]
      %v257 = vld [vmem:[%s254 + $0x10] sm:$0xff]
      %258 = vxpose.xlu0.b32.start [1/16] %v257, 128
      %259 = vxpose.xlu0.b32.cont [2/16] 0.0, 128
      %260 = vxpose.xlu0.b32.cont [3/16] 0.0, 128
      %261 = vxpose.xlu0.b32.cont [4/16] 0.0, 128
      %262 = vxpose.xlu0.b32.cont [5/16] 0.0, 128
      %263 = vxpose.xlu0.b32.cont [6/16] 0.0, 128
      %264 = vxpose.xlu0.b32.cont [7/16] 0.0, 128
      %265 = vxpose.xlu0.b32.cont [8/16] 0.0, 128
      %266 = vxpose.xlu0.b32.cont [9/16] 0.0, 128
      %267 = vxpose.xlu0.b32.cont [10/16] 0.0, 128
      %268 = vxpose.xlu0.b32.cont [11/16] 0.0, 128
      %269 = vxpose.xlu0.b32.cont [12/16] 0.0, 128
      %270 = vxpose.xlu0.b32.cont [13/16] 0.0, 128
      %271 = vxpose.xlu0.b32.cont [14/16] 0.0, 128
      %272 = vxpose.xlu0.b32.cont [15/16] 0.0, 128
      %273 = vxpose.xlu0.b32.end [16/16] 0.0, 128
      %v274 = vpop.trf.xlu0
      %v275 = vpop.trf.xlu0
      %v276 = vpop.trf.xlu0
      %v277 = vpop.trf.xlu0
      %v278 = vpop.trf.xlu0
      %v279 = vpop.trf.xlu0
      %v280 = vpop.trf.xlu0
      %v281 = vpop.trf.xlu0
      %v282 = vpop.trf.xlu0
      %v283 = vpop.trf.xlu0
      %v284 = vpop.trf.xlu0
      %v285 = vpop.trf.xlu0
      %v286 = vpop.trf.xlu0
      %v287 = vpop.trf.xlu0
      %v288 = vpop.trf.xlu0
      %v289 = vpop.trf.xlu0
      %vm290 = vcmask 64512
      %v292 = vsel %vm290, %v274, 0
      %v295 = vsel %vm290, %v275, 0
      %v298 = vsel %vm290, %v276, 0
      %v301 = vsel %vm290, %v277, 0
      %v304 = vsel %vm290, %v278, 0
      %v307 = vsel %vm290, %v279, 0
      %v310 = vsel %vm290, %v280, 0
      %v313 = vsel %vm290, %v281, 0
      %v316 = vsel %vm290, %v282, 0
      %v319 = vsel %vm290, %v283, 0
      %v322 = vsel %vm290, %v284, 0
      %v325 = vsel %vm290, %v285, 0
      %v328 = vsel %vm290, %v286, 0
      %v331 = vsel %vm290, %v287, 0
      %v334 = vsel %vm290, %v288, 0
      %v337 = vsel %vm290, %v289, 0
      %339 = vmatprep.subr.mxu0 0.0
      %340 = vmatpush1.msra.mxu0 0.0
      %341 = vmatprep.subr.mxu0 0.0
      %342 = vmatpush1.msra.mxu0 0.0
      %343 = vmatprep.subr.mxu0 0.0
      %344 = vmatpush1.msra.mxu0 0.0
      %345 = vmatprep.subr.mxu0 0.0
      %346 = vmatpush1.msra.mxu0 0.0
      %347 = vmatprep.subr.mxu0 0.0
      %348 = vmatpush1.msra.mxu0 0.0
      %349 = vmatprep.subr.mxu0 0.0
      %350 = vmatpush1.msra.mxu0 0.0
      %351 = vmatprep.subr.mxu0 0.0
      %352 = vmatpush1.msra.mxu0 0.0
      %353 = vmatprep.subr.mxu0 0.0
      %354 = vmatpush1.msra.mxu0 0.0
      %355 = vmatprep.subr.mxu0 0.0
      %356 = vmatpush1.msra.mxu0 0.0
      %357 = vmatprep.subr.mxu0 0.0
      %358 = vmatpush1.msra.mxu0 0.0
      %359 = vmatprep.subr.mxu0 0.0
      %360 = vmatpush1.msra.mxu0 0.0
      %361 = vmatprep.subr.mxu0 0.0
      %362 = vmatpush1.msra.mxu0 0.0
      %363 = vmatprep.subr.mxu0 0.0
      %364 = vmatpush1.msra.mxu0 0.0
      %365 = vmatprep.subr.mxu0 0.0
      %366 = vmatpush1.msra.mxu0 0.0
      %367 = vmatprep.subr.mxu0 0.0
      %368 = vmatpush1.msra.mxu0 0.0
      %369 = vmatprep.subr.mxu0 0.0
      %370 = vmatpush1.msra.mxu0 %v255
      %371 = vmatprep.subr.mxu0 0.0
      %372 = vmatpush2.msra.mxu0 0.0
      %373 = vmatprep.subr.mxu0 0.0
      %374 = vmatpush2.msra.mxu0 0.0
      %375 = vmatprep.subr.mxu0 0.0
      %376 = vmatpush2.msra.mxu0 0.0
      %377 = vmatprep.subr.mxu0 0.0
      %378 = vmatpush2.msra.mxu0 0.0
      %379 = vmatprep.subr.mxu0 0.0
      %380 = vmatpush2.msra.mxu0 0.0
      %381 = vmatprep.subr.mxu0 0.0
      %382 = vmatpush2.msra.mxu0 0.0
      %383 = vmatprep.subr.mxu0 0.0
      %384 = vmatpush2.msra.mxu0 0.0
      %385 = vmatprep.subr.mxu0 0.0
      %386 = vmatpush2.msra.mxu0 0.0
      %387 = vmatprep.subr.mxu0 0.0
      %388 = vmatpush2.msra.mxu0 0.0
      %389 = vmatprep.subr.mxu0 0.0
      %390 = vmatpush2.msra.mxu0 0.0
      %391 = vmatprep.subr.mxu0 0.0
      %392 = vmatpush2.msra.mxu0 0.0
      %393 = vmatprep.subr.mxu0 0.0
      %394 = vmatpush2.msra.mxu0 0.0
      %395 = vmatprep.subr.mxu0 0.0
      %396 = vmatpush2.msra.mxu0 0.0
      %397 = vmatprep.subr.mxu0 0.0
      %398 = vmatpush2.msra.mxu0 0.0
      %399 = vmatprep.subr.mxu0 0.0
      %400 = vmatpush2.msra.mxu0 0.0
      %401 = vmatprep.subr.mxu0 0.0
      %402 = vmatpush2.msra.mxu0 0.0
      %403 = vmatprep.mubr.f32.mxu0 0.0
      %404 = vmatmul.mubr.f32.gmra.mxu0 %v292
      %v405 = vpop.f32.mrf.mxu0
      %v406 = vadd.f32 0.0, %v405
      %v407 = vpop.f32.mrf.mxu0
      %408 = vmatprep.mubr.f32.mxu0 0.0
      %409 = vmatmul.mubr.f32.gmra.mxu0 %v295
      %v410 = vpop.f32.mrf.mxu0
      %v411 = vadd.f32 0.0, %v410
      %v412 = vpop.f32.mrf.mxu0
      %413 = vmatprep.mubr.f32.mxu0 0.0
      %414 = vmatmul.mubr.f32.gmra.mxu0 %v298
      %v415 = vpop.f32.mrf.mxu0
      %v416 = vpop.f32.mrf.mxu0
      %417 = vmatprep.mubr.f32.mxu0 0.0
      %418 = vmatmul.mubr.f32.gmra.mxu0 %v301
      %v419 = vpop.f32.mrf.mxu0
      %v420 = vpop.f32.mrf.mxu0
      %421 = vmatprep.mubr.f32.mxu0 0.0
      %422 = vmatmul.mubr.f32.gmra.mxu0 %v304
      %v423 = vpop.f32.mrf.mxu0
      %v424 = vpop.f32.mrf.mxu0
      %425 = vmatprep.mubr.f32.mxu0 0.0
      %426 = vmatmul.mubr.f32.gmra.mxu0 %v307
      %v427 = vpop.f32.mrf.mxu0
      %v428 = vpop.f32.mrf.mxu0
      %429 = vmatprep.mubr.f32.mxu0 0.0
      %430 = vmatmul.mubr.f32.gmra.mxu0 %v310
      %v431 = vpop.f32.mrf.mxu0
      %v432 = vpop.f32.mrf.mxu0
      %433 = vmatprep.mubr.f32.mxu0 0.0
      %434 = vmatmul.mubr.f32.gmra.mxu0 %v313
      %v435 = vpop.f32.mrf.mxu0
      %v436 = vpop.f32.mrf.mxu0
      %437 = vmatprep.mubr.f32.mxu0 0.0
      %438 = vmatmul.mubr.f32.gmra.mxu0 %v316
      %v439 = vpop.f32.mrf.mxu0
      %v440 = vpop.f32.mrf.mxu0
      %441 = vmatprep.mubr.f32.mxu0 0.0
      %442 = vmatmul.mubr.f32.gmra.mxu0 %v319
      %v443 = vpop.f32.mrf.mxu0
      %v444 = vpop.f32.mrf.mxu0
      %445 = vmatprep.mubr.f32.mxu0 0.0
      %446 = vmatmul.mubr.f32.gmra.mxu0 %v322
      %v447 = vpop.f32.mrf.mxu0
      %v448 = vpop.f32.mrf.mxu0
      %449 = vmatprep.mubr.f32.mxu0 0.0
      %450 = vmatmul.mubr.f32.gmra.mxu0 %v325
      %v451 = vpop.f32.mrf.mxu0
      %v452 = vpop.f32.mrf.mxu0
      %453 = vmatprep.mubr.f32.mxu0 0.0
      %454 = vmatmul.mubr.f32.gmra.mxu0 %v328
      %v455 = vpop.f32.mrf.mxu0
      %v456 = vpop.f32.mrf.mxu0
      %457 = vmatprep.mubr.f32.mxu0 0.0
      %458 = vmatmul.mubr.f32.gmra.mxu0 %v331
      %v459 = vpop.f32.mrf.mxu0
      %v460 = vpop.f32.mrf.mxu0
      %461 = vmatprep.mubr.f32.mxu0 0.0
      %462 = vmatmul.mubr.f32.gmra.mxu0 %v334
      %v463 = vpop.f32.mrf.mxu0
      %v464 = vpop.f32.mrf.mxu0
      %465 = vmatprep.mubr.f32.mxu0 0.0
      %466 = vmatmul.mubr.f32.gmra.mxu0 %v337
      %v467 = vpop.f32.mrf.mxu0
      %v468 = vpop.f32.mrf.mxu0
      %469 = vdwg.mxu0
      %v470 = vadd.f32 %v406, %v242
      %v471 = vadd.f32 %v411, %v242
      %472 = vmax.xlane.f32.xlu0 %v470
      %v473 = vpop.xlane.xlu0 %472
      %474 = vmax.xlane.f32.xlu0 %v471
      %v475 = vpop.xlane.xlu0 %474
      %v476 = vsub.f32 %v470, %v473
      %v477 = vsub.f32 %v471, %v475
      %v478 = vmul.f32 %v476, 1.442695
      %v479 = vpow.pop %v478
      %v480 = vmul.f32 %v477, 1.442695
      %v481 = vpow.pop %v480
      %482 = vadd.xlane.f32.xlu0 %v479
      %v483 = vpop.xlane.xlu0 %482
      %484 = vadd.xlane.f32.xlu0 %v481
      %v485 = vpop.xlane.xlu0 %484
      %v486 = vrcp.pop %v483
      %v487 = vrcp.pop %v485
      %v488 = vmul.f32 %v479, %v486
      %v489 = vmul.f32 %v481, %v487
      %490 = vmatprep.subr.mxu0 0.0
      %491 = vmatpush1.msra.mxu0 0.0
      %492 = vmatprep.subr.mxu0 0.0
      %493 = vmatpush1.msra.mxu0 0.0
      %494 = vmatprep.subr.mxu0 0.0
      %495 = vmatpush1.msra.mxu0 0.0
      %496 = vmatprep.subr.mxu0 0.0
      %497 = vmatpush1.msra.mxu0 0.0
      %498 = vmatprep.subr.mxu0 0.0
      %499 = vmatpush1.msra.mxu0 0.0
      %500 = vmatprep.subr.mxu0 0.0
      %501 = vmatpush1.msra.mxu0 0.0
      %502 = vmatprep.subr.mxu0 0.0
      %503 = vmatpush1.msra.mxu0 0.0
      %504 = vmatprep.subr.mxu0 0.0
      %505 = vmatpush1.msra.mxu0 0.0
      %506 = vmatprep.subr.mxu0 0.0
      %507 = vmatpush1.msra.mxu0 0.0
      %508 = vmatprep.subr.mxu0 0.0
      %509 = vmatpush1.msra.mxu0 0.0
      %510 = vmatprep.subr.mxu0 0.0
      %511 = vmatpush1.msra.mxu0 0.0
      %512 = vmatprep.subr.mxu0 0.0
      %513 = vmatpush1.msra.mxu0 0.0
      %514 = vmatprep.subr.mxu0 0.0
      %515 = vmatpush1.msra.mxu0 0.0
      %516 = vmatprep.subr.mxu0 0.0
      %517 = vmatpush1.msra.mxu0 0.0
      %518 = vmatprep.subr.mxu0 0.0
      %519 = vmatpush1.msra.mxu0 %v489
      %520 = vmatprep.subr.mxu0 0.0
      %521 = vmatpush1.msra.mxu0 %v488
      %522 = vmatprep.subr.mxu0 0.0
      %523 = vmatpush2.msra.mxu0 0.0
      %524 = vmatprep.subr.mxu0 0.0
      %525 = vmatpush2.msra.mxu0 0.0
      %526 = vmatprep.subr.mxu0 0.0
      %527 = vmatpush2.msra.mxu0 0.0
      %528 = vmatprep.subr.mxu0 0.0
      %529 = vmatpush2.msra.mxu0 0.0
      %530 = vmatprep.subr.mxu0 0.0
      %531 = vmatpush2.msra.mxu0 0.0
      %532 = vmatprep.subr.mxu0 0.0
      %533 = vmatpush2.msra.mxu0 0.0
      %534 = vmatprep.subr.mxu0 0.0
      %535 = vmatpush2.msra.mxu0 0.0
      %536 = vmatprep.subr.mxu0 0.0
      %537 = vmatpush2.msra.mxu0 0.0
      %538 = vmatprep.subr.mxu0 0.0
      %539 = vmatpush2.msra.mxu0 0.0
      %540 = vmatprep.subr.mxu0 0.0
      %541 = vmatpush2.msra.mxu0 0.0
      %542 = vmatprep.subr.mxu0 0.0
      %543 = vmatpush2.msra.mxu0 0.0
      %544 = vmatprep.subr.mxu0 0.0
      %545 = vmatpush2.msra.mxu0 0.0
      %546 = vmatprep.subr.mxu0 0.0
      %547 = vmatpush2.msra.mxu0 0.0
      %548 = vmatprep.subr.mxu0 0.0
      %549 = vmatpush2.msra.mxu0 0.0
      %550 = vmatprep.subr.mxu0 0.0
      %551 = vmatpush2.msra.mxu0 0.0
      %552 = vmatprep.subr.mxu0 0.0
      %553 = vmatpush2.msra.mxu0 0.0
      %554 = vmatprep.mubr.f32.mxu0 0.0
      %555 = vmatmul.mubr.f32.gmra.mxu0 %v256
      %v556 = vpop.f32.mrf.mxu0
      %v557 = vadd.f32 0.0, %v556
      %v558 = vpop.f32.mrf.mxu0
      %559 = vdwg.mxu0
      %s560 = scalar_lea.vmem [#allocation8], %s249
      %vm561 = vcmask 130048
      %562 = vst.msk [vmem:[%s560] sm:$0xff] %vm561, %v557
    $region26: #{tpu_custom_call.1} parent=1 // loop_footer
      %s248 = sadd.s32 1, %s244
    $region27: #{tpu_custom_call.1} parent=1 // loop_footer_branch
      %243 = sbr.rel target = $region23
    $region28: #{tpu_custom_call.1} parent=1 // loop_exit
      _
    // Predicated region
    $region29: #{tpu_custom_call.1} parent=1 // pred_check
      _
    $region30: #{tpu_custom_call.1} parent=1 // pred_check_branch
      %564 = sbr.rel (0) target = $region32
    $region31: #{tpu_custom_call.1} parent=1 // pred_region
      %s566 = ssub.s32 256, 256
      %567 = vsyncadd [#allocation5], %s566
      %s568 = sshll.u32 [#allocation8], 4
      %s569 = int_to_ptr.vmem [resolvable:$true] %s568
      %574 = dma.vmem_to_hbm [thread:$0]  %s569, 256, %s3, [#allocation5], 128, 128, 8
    $region32: #{tpu_custom_call.1} parent=1 // pred_fallthru
      _
    // Predicated region
    $region33: #{tpu_custom_call.1} parent=1 // pred_check
      _
    $region34: #{tpu_custom_call.1} parent=1 // pred_check_branch
      %576 = sbr.rel (0) target = $region36
    $region35: #{tpu_custom_call.1} parent=1 // pred_region
      %577 = dma.done [#allocation5], 256
    $region36: #{tpu_custom_call.1} parent=1 // pred_fallthru
      _
    %578 = vsyncpa [#allocation4], 1
    %579 = vsyncpa [#allocation7], 1
    %580 = vsyncpa [#allocation5], 1

</llo_original>
